<compile_context>
chip_gen: v6e
topology: v6e:2x2x1
jax: 0.10.0
libtpu: 0.0.40
codegen_flags: <defaults>
</compile_context>

<pallas_src>
import math

import jax
import jax.numpy as jnp
from jax import lax
from jax.experimental import pallas as pl
from jax.experimental.pallas import tpu as pltpu


_INV_SQRT2 = 1.0 / math.sqrt(2.0)


def _round_up(n, m):
    return ((n + m - 1) // m) * m


def _cdiv(a, b):
    return (a + b - 1) // b


def _gelu_exact(x):
    # PyTorch nn.GELU default: exact erf-based GELU.
    # TODO(synk): switch to the tanh approximation (EUP slot) only if a bundle
    # dump shows the VALU slot saturated (most likely on v5e).
    return 0.5 * x * (1.0 + lax.erf(x * _INV_SQRT2))


# --------------------------------------------------------------------------
# Kernels
# --------------------------------------------------------------------------
def _mlp_kernel_fused(x_ref, w1_ref, b1_ref, w2_ref, b2_ref, o_ref):
    """Single hidden tile: weights fully resident, no accumulator scratch."""
    h = jnp.dot(x_ref[...], w1_ref[...], preferred_element_type=jnp.float32)
    h = _gelu_exact(h + b1_ref[...])
    y = jnp.dot(h.astype(w2_ref.dtype), w2_ref[...],
                preferred_element_type=jnp.float32)
    o_ref[...] = (y + b2_ref[...]).astype(o_ref.dtype)


def _mlp_kernel_ktiled(x_ref, w1_ref, b1_ref, w2_ref, b2_ref, o_ref, acc_ref):
    """Grid = (M tiles [parallel], hidden tiles [arbitrary, reduction])."""
    k = pl.program_id(1)

    @pl.when(k == 0)
    def _():
        acc_ref[...] = jnp.zeros_like(acc_ref)

    h = jnp.dot(x_ref[...], w1_ref[...], preferred_element_type=jnp.float32)
    h = _gelu_exact(h + b1_ref[...])                           # (tm, th)
    acc_ref[...] += jnp.dot(h.astype(w2_ref.dtype), w2_ref[...],
                            preferred_element_type=jnp.float32)

    @pl.when(k == pl.num_programs(1) - 1)
    def _():
        o_ref[...] = (acc_ref[...] + b2_ref[...]).astype(o_ref.dtype)


# --------------------------------------------------------------------------
# Tiling helpers
# --------------------------------------------------------------------------
def _vmem_budget_bytes():
    # ~75% of per-core physical VMEM: ~48 MiB on v7x (64 MiB VMEM),
    # ~96 MiB on v5e/v6e (128 MiB VMEM).  Fall back to the smallest (v7x).
    cap = 64 << 20
    try:
        cap = int(pltpu.get_tpu_info().vmem_capacity_bytes)
    except Exception:
        pass
    return (cap * 3) // 4


def _tile_footprint(tm, d_in_p, th, d_out_p, xi, wi, oi, num_k):
    fp = 2 * tm * d_in_p * xi                       # x tile (double-buffered)
    fp += 2 * tm * d_out_p * oi                     # out tile
    fp += 2 * (d_in_p * th + th * d_out_p) * wi     # W1/W2 slices (2 buffers)
    fp += 2 * (th + d_out_p) * 4                    # biases
    fp += 2 * tm * th * 4                           # f32 GELU intermediate + temps
    if num_k > 1:
        fp += tm * d_out_p * 4                      # f32 accumulator scratch
    return fp


def _choose_hidden_tile(d_in_p, d_hid_p, d_out_p, tm, xi, wi, oi, budget, th_max):
    """Largest th (multiple of 128 that evenly divides d_hid_p -> zero hidden-dim
    over-padding) whose tile footprint fits the VMEM budget."""
    n = d_hid_p // 128
    for d in range(n, 0, -1):
        if n % d:
            continue
        th = d * 128
        if th_max is not None and th > th_max:
            continue
        if _tile_footprint(tm, d_in_p, th, d_out_p, xi, wi, oi,
                           d_hid_p // th) <= budget:
            return th
    return 128


# --------------------------------------------------------------------------
# Parameter prep (call once per set of weights, not per forward)
# --------------------------------------------------------------------------
def prepare_mlp_params(w1, b1, w2, b2, *, compute_dtype=jnp.bfloat16):
    """Pad feature dims to multiples of 128 and cast weights to the MXU dtype.
    w1: (D_in, D_hid), w2: (D_hid, D_out)  (transposed from nn.Linear)."""
    D_in, D_hid = w1.shape
    D_out = w2.shape[1]
    wdt = compute_dtype if compute_dtype is not None else w1.dtype
    d_in_p = _round_up(D_in, 128)
    d_hid_p = _round_up(D_hid, 128)
    d_out_p = _round_up(D_out, 128)

    w1p = jnp.pad(w1.astype(wdt), ((0, d_in_p - D_in), (0, d_hid_p - D_hid)))
    w2p = jnp.pad(w2.astype(wdt), ((0, d_hid_p - D_hid), (0, d_out_p - D_out)))
    b1p = jnp.pad(b1.astype(jnp.float32), (0, d_hid_p - D_hid)).reshape(1, d_hid_p)
    b2p = jnp.pad(b2.astype(jnp.float32), (0, d_out_p - D_out)).reshape(1, d_out_p)
    return dict(w1=w1p, b1=b1p, w2=w2p, b2=b2p,
                dims=(D_in, D_hid, D_out), compute_dtype=compute_dtype)


# --------------------------------------------------------------------------
# Forward
# --------------------------------------------------------------------------
def mlp_pallas_prepared(x, params, *, tm=512, th_max=None):
    """x: (B, N, D_in); params from prepare_mlp_params."""
    w1p, b1p, w2p, b2p = params["w1"], params["b1"], params["w2"], params["b2"]
    D_in, D_hid, D_out = params["dims"]
    compute_dtype = params["compute_dtype"]

    B, N, _ = x.shape
    M = B * N
    out_dtype = x.dtype
    xdt = compute_dtype if compute_dtype is not None else x.dtype

    d_in_p, d_hid_p = w1p.shape
    d_out_p = w2p.shape[1]

    x2 = x.reshape(M, D_in).astype(xdt)
    if d_in_p != D_in:
        x2 = jnp.pad(x2, ((0, 0), (0, d_in_p - D_in)))   # exact: padded W1 rows are 0

    xi = jnp.dtype(xdt).itemsize
    wi = jnp.dtype(w1p.dtype).itemsize
    oi = jnp.dtype(out_dtype).itemsize
    sub = 8 if xi == 4 else 16                            # sublane multiple

    tm_eff = min(tm, _round_up(M, sub))
    if _cdiv(M, tm_eff) == 1 and M > 256:
        # Keep >=2 M tiles so both TensorCores get work on megacore parts (v7x).
        tm_eff = _round_up(_cdiv(M, 2), sub)

    budget = _vmem_budget_bytes()
    th = _choose_hidden_tile(d_in_p, d_hid_p, d_out_p, tm_eff, xi, wi, oi,
                             budget, th_max)
    num_k = d_hid_p // th
    footprint = _tile_footprint(tm_eff, d_in_p, th, d_out_p, xi, wi, oi, num_k)
    vmem_limit = int(min(max(footprint + (4 << 20), 32 << 20), budget))
    num_m = _cdiv(M, tm_eff)

    if num_k == 1:
        # Fast path: constant index maps -> W1/W2/b1/b2 fetched once and kept
        # resident across all M tiles; no accumulator scratch.
        out = pl.pallas_call(
            _mlp_kernel_fused,
            out_shape=jax.ShapeDtypeStruct((M, d_out_p), out_dtype),
            grid_spec=pltpu.PrefetchScalarGridSpec(
                num_scalar_prefetch=0,
                grid=(num_m,),
                in_specs=[
                    pl.BlockSpec((tm_eff, d_in_p), lambda i: (i, 0)),   # x tile
                    pl.BlockSpec((d_in_p, d_hid_p), lambda i: (0, 0)),  # W1 (resident)
                    pl.BlockSpec((1, d_hid_p), lambda i: (0, 0)),       # b1 (resident)
                    pl.BlockSpec((d_hid_p, d_out_p), lambda i: (0, 0)), # W2 (resident)
                    pl.BlockSpec((1, d_out_p), lambda i: (0, 0)),       # b2 (resident)
                ],
                out_specs=pl.BlockSpec((tm_eff, d_out_p), lambda i: (i, 0)),
            ),
            compiler_params=pltpu.CompilerParams(
                dimension_semantics=("parallel",),
                vmem_limit_bytes=vmem_limit,
            ),
        )(x2, w1p, b1p, w2p, b2p)
    else:
        # K-tiled fallback (weights too large for VMEM): hidden-dim reduction
        # with f32 accumulator, init at k==0, finalize at last k.
        out = pl.pallas_call(
            _mlp_kernel_ktiled,
            out_shape=jax.ShapeDtypeStruct((M, d_out_p), out_dtype),
            grid_spec=pltpu.PrefetchScalarGridSpec(
                num_scalar_prefetch=0,
                grid=(num_m, num_k),
                in_specs=[
                    pl.BlockSpec((tm_eff, d_in_p), lambda i, k: (i, 0)),  # x tile
                    pl.BlockSpec((d_in_p, th), lambda i, k: (0, k)),      # W1 slice
                    pl.BlockSpec((1, th), lambda i, k: (0, k)),           # b1 slice
                    pl.BlockSpec((th, d_out_p), lambda i, k: (k, 0)),     # W2 slice
                    pl.BlockSpec((1, d_out_p), lambda i, k: (0, 0)),      # b2 (resident)
                ],
                out_specs=pl.BlockSpec((tm_eff, d_out_p), lambda i, k: (i, 0)),
                scratch_shapes=[pltpu.VMEM((tm_eff, d_out_p), jnp.float32)],
            ),
            compiler_params=pltpu.CompilerParams(
                dimension_semantics=("parallel", "arbitrary"),
                vmem_limit_bytes=vmem_limit,
            ),
        )(x2, w1p, b1p, w2p, b2p)

    if d_out_p != D_out:
        # TODO(synk): fuse this slice into the consumer to avoid an extra HBM pass.
        out = out[:, :D_out]
    return out.reshape(B, N, D_out)


def mlp_pallas(x, w1, b1, w2, b2, *, compute_dtype=jnp.bfloat16, tm=512,
               th_max=None):
    """Convenience wrapper: per-call param prep + forward."""
    params = prepare_mlp_params(w1, b1, w2, b2, compute_dtype=compute_dtype)
    return mlp_pallas_prepared(x, params, tm=tm, th_max=th_max)


def mlp_reference(x, w1, b1, w2, b2):
    h = _gelu_exact(jnp.dot(x, w1) + b1)
    return jnp.dot(h, w2) + b2


# --------------------------------------------------------------------------
# Self-test
# --------------------------------------------------------------------------
if __name__ == "__main__":
    key = jax.random.PRNGKey(0)

    # --- Test 1: small ViT-style MLP, default bf16 MXU path, single-K fast path.
    B, N = 2, 8
    D_in, D_hid = 32, 64
    D_out = D_in

    kx, kw1, kb1, kw2, kb2, k2, k3 = jax.random.split(key, 7)
    bound1 = 1.0 / math.sqrt(D_in)
    bound2 = 1.0 / math.sqrt(D_hid)
    x = jax.random.normal(kx, (B, N, D_in), dtype=jnp.float32)
    w1 = jax.random.uniform(kw1, (D_in, D_hid), jnp.float32, -bound1, bound1)
    b1 = jax.random.uniform(kb1, (D_hid,), jnp.float32, -bound1, bound1)
    w2 = jax.random.uniform(kw2, (D_hid, D_out), jnp.float32, -bound2, bound2)
    b2 = jax.random.uniform(kb2, (D_out,), jnp.float32, -bound2, bound2)

    y = mlp_pallas(x, w1, b1, w2, b2)                 # bf16 default
    jax.block_until_ready(y)
    y_ref = mlp_reference(x, w1, b1, w2, b2)
    assert y.shape == (B, N, D_out)
    assert y.dtype == x.dtype
    assert jnp.allclose(y, y_ref, atol=5e-2, rtol=5e-2)   # bf16 operand precision

    # --- Test 2: f32 path, forced hidden-dim tiling (accumulator kernel) and a
    #     partial last M tile; tight tolerance.
    B2, N2 = 2, 320                       # M = 640 -> tiles 256 + 256 + 128
    Di2, Dh2, Do2 = 128, 256, 128
    ka, kb, kc, kd, ke = jax.random.split(k2, 5)
    x_l = jax.random.normal(ka, (B2, N2, Di2), dtype=jnp.float32)
    w1_l = jax.random.normal(kb, (Di2, Dh2), dtype=jnp.float32) * 0.05
    b1_l = jax.random.normal(kc, (Dh2,), dtype=jnp.float32) * 0.05
    w2_l = jax.random.normal(kd, (Dh2, Do2), dtype=jnp.float32) * 0.05
    b2_l = jax.random.normal(ke, (Do2,), dtype=jnp.float32) * 0.05

    y_l = mlp_pallas(x_l, w1_l, b1_l, w2_l, b2_l,
                     compute_dtype=None, tm=256, th_max=128)
    jax.block_until_ready(y_l)
    y_l_ref = mlp_reference(x_l, w1_l, b1_l, w2_l, b2_l)
    assert y_l.shape == (B2, N2, Do2)
    assert jnp.allclose(y_l, y_l_ref, atol=2e-4, rtol=2e-4)

    # --- Test 3: f32 path with non-128-aligned feature dims (padding + slice).
    Di3, Dh3, Do3 = 48, 96, 40
    kf, kg, kh, ki, kj = jax.random.split(k3, 5)
    x_s = jax.random.normal(kf, (2, 8, Di3), dtype=jnp.float32)
    w1_s = jax.random.normal(kg, (Di3, Dh3), dtype=jnp.float32) * 0.1
    b1_s = jax.random.normal(kh, (Dh3,), dtype=jnp.float32) * 0.1
    w2_s = jax.random.normal(ki, (Dh3, Do3), dtype=jnp.float32) * 0.1
    b2_s = jax.random.normal(kj, (Do3,), dtype=jnp.float32) * 0.1

    y_s = mlp_pallas(x_s, w1_s, b1_s, w2_s, b2_s, compute_dtype=None)
    jax.block_until_ready(y_s)
    y_s_ref = mlp_reference(x_s, w1_s, b1_s, w2_s, b2_s)
    assert y_s.shape == (2, 8, Do3)
    assert jnp.allclose(y_s, y_s_ref, atol=1e-5, rtol=1e-5)

    print("KERNEL_OK")
</pallas_src>

<mosaic_0001>
module attributes {stable_mosaic.version = 11 : i64} {
  func.func @_mlp_kernel_fused(%arg0: i32, %arg1: memref<16x128xbf16, #tpu.memory_space<vmem>>, %arg2: memref<128x128xbf16, #tpu.memory_space<vmem>>, %arg3: memref<1x128xf32, #tpu.memory_space<vmem>>, %arg4: memref<128x128xbf16, #tpu.memory_space<vmem>>, %arg5: memref<1x128xf32, #tpu.memory_space<vmem>>, %arg6: memref<16x128xf32, #tpu.memory_space<vmem>>) attributes {dimension_semantics = [#tpu.dimension_semantics<parallel>], iteration_bounds = array<i64: 1>, scalar_prefetch = 0 : i64, scratch_operands = 0 : i64, tpu.core_type = #tpu.core_type<tc>, window_params = [{transform_indices = @transform_0, window_bounds = array<i64: 16, 128>}, {pipeline_mode = #tpu.pipeline_mode<synchronous>, transform_indices = @transform_1, window_bounds = array<i64: 128, 128>}, {pipeline_mode = #tpu.pipeline_mode<synchronous>, transform_indices = @transform_2, window_bounds = array<i64: 1, 128>}, {pipeline_mode = #tpu.pipeline_mode<synchronous>, transform_indices = @transform_3, window_bounds = array<i64: 128, 128>}, {pipeline_mode = #tpu.pipeline_mode<synchronous>, transform_indices = @transform_4, window_bounds = array<i64: 1, 128>}, {transform_indices = @transform_5, window_bounds = array<i64: 16, 128>}]} {
    %c0 = arith.constant 0 : index
    %c0_0 = arith.constant 0 : index
    %0 = vector.load %arg1[%c0, %c0_0] : memref<16x128xbf16, #tpu.memory_space<vmem>>, vector<16x128xbf16>
    %c0_1 = arith.constant 0 : index
    %c0_2 = arith.constant 0 : index
    %1 = vector.load %arg2[%c0_1, %c0_2] : memref<128x128xbf16, #tpu.memory_space<vmem>>, vector<128x128xbf16>
    %cst = arith.constant dense<0.000000e+00> : vector<16x128xf32>
    %2 = tpu.matmul %0, %1, %cst {dimension_numbers = #tpu.dot_dimension_numbers<[1], [0], [0], [1], [0, 0, 1, 1], [], []>} : vector<16x128xbf16>, vector<128x128xbf16>, vector<16x128xf32> -> vector<16x128xf32>
    %c0_3 = arith.constant 0 : index
    %c0_4 = arith.constant 0 : index
    %3 = vector.load %arg3[%c0_3, %c0_4] : memref<1x128xf32, #tpu.memory_space<vmem>>, vector<1x128xf32>
    %4 = vector.broadcast %3 : vector<1x128xf32> to vector<16x128xf32>
    %5 = arith.addf %2, %4 : vector<16x128xf32>
    %cst_5 = arith.constant 5.000000e-01 : f32
    %6 = vector.broadcast %cst_5 : f32 to vector<16x128xf32>
    %7 = arith.mulf %6, %5 : vector<16x128xf32>
    %cst_6 = arith.constant 0.707106769 : f32
    %8 = vector.broadcast %cst_6 : f32 to vector<16x128xf32>
    %9 = arith.mulf %5, %8 : vector<16x128xf32>
    %10 = math.erf %9 : vector<16x128xf32>
    %cst_7 = arith.constant 1.000000e+00 : f32
    %11 = vector.broadcast %cst_7 : f32 to vector<16x128xf32>
    %12 = arith.addf %11, %10 : vector<16x128xf32>
    %13 = arith.mulf %7, %12 : vector<16x128xf32>
    %14 = arith.truncf %13 : vector<16x128xf32> to vector<16x128xbf16>
    %c0_8 = arith.constant 0 : index
    %c0_9 = arith.constant 0 : index
    %15 = vector.load %arg4[%c0_8, %c0_9] : memref<128x128xbf16, #tpu.memory_space<vmem>>, vector<128x128xbf16>
    %cst_10 = arith.constant dense<0.000000e+00> : vector<16x128xf32>
    %16 = tpu.matmul %14, %15, %cst_10 {dimension_numbers = #tpu.dot_dimension_numbers<[1], [0], [0], [1], [0, 0, 1, 1], [], []>} : vector<16x128xbf16>, vector<128x128xbf16>, vector<16x128xf32> -> vector<16x128xf32>
    %c0_11 = arith.constant 0 : index
    %c0_12 = arith.constant 0 : index
    %17 = vector.load %arg5[%c0_11, %c0_12] : memref<1x128xf32, #tpu.memory_space<vmem>>, vector<1x128xf32>
    %18 = vector.broadcast %17 : vector<1x128xf32> to vector<16x128xf32>
    %19 = arith.addf %16, %18 : vector<16x128xf32>
    %c0_13 = arith.constant 0 : index
    %c0_14 = arith.constant 0 : index
    %20 = vector.load %arg6[%c0_13, %c0_14] : memref<16x128xf32, #tpu.memory_space<vmem>>, vector<16x128xf32>
    tpu.vector_store %arg6[%c0_13, %c0_14], %19 {strides = array<i32>} : memref<16x128xf32, #tpu.memory_space<vmem>>, vector<16x128xf32>,
    return
  }
  func.func @transform_0(%arg0: i32) -> (i32, i32) {
    %c0_i32 = arith.constant 0 : i32
    %c0_i32_0 = arith.constant 0 : i32
    return %arg0, %c0_i32 : i32, i32
  }
  func.func @transform_1(%arg0: i32) -> (i32, i32) {
    %c0_i32 = arith.constant 0 : i32
    %c0_i32_0 = arith.constant 0 : i32
    %c0_i32_1 = arith.constant 0 : i32
    return %c0_i32, %c0_i32_0 : i32, i32
  }
  func.func @transform_2(%arg0: i32) -> (i32, i32) {
    %c0_i32 = arith.constant 0 : i32
    %c0_i32_0 = arith.constant 0 : i32
    %c0_i32_1 = arith.constant 0 : i32
    return %c0_i32, %c0_i32_0 : i32, i32
  }
  func.func @transform_3(%arg0: i32) -> (i32, i32) {
    %c0_i32 = arith.constant 0 : i32
    %c0_i32_0 = arith.constant 0 : i32
    %c0_i32_1 = arith.constant 0 : i32
    return %c0_i32, %c0_i32_0 : i32, i32
  }
  func.func @transform_4(%arg0: i32) -> (i32, i32) {
    %c0_i32 = arith.constant 0 : i32
    %c0_i32_0 = arith.constant 0 : i32
    %c0_i32_1 = arith.constant 0 : i32
    return %c0_i32, %c0_i32_0 : i32, i32
  }
  func.func @transform_5(%arg0: i32) -> (i32, i32) {
    %c0_i32 = arith.constant 0 : i32
    %c0_i32_0 = arith.constant 0 : i32
    return %arg0, %c0_i32 : i32, i32
  }
}

</mosaic_0001>

<llo_original>
// kernel: tpu_custom_call.1
$region0: #{tpu_custom_call.1}
  #allocation0 [shape = 'u32[]', space=smem, size = 0x4, offset = 0x4, fixed_abs, tag = 'smem constant byte address 0x4 - core index']
  #allocation1 [shape = 'u32[144,128]{1,0:T(1,128)}', space=vmem, size = 0x12000, scoped, tag = 'internal scratch']
  %s0 = inlined_call_operand.hbm [shape: bf16[16,128], index: 0, kind: input, shape index: {}]
  %s1 = inlined_call_operand.hbm [shape: bf16[128,128], index: 1, kind: input, shape index: {}]
  %s2 = inlined_call_operand.vmem [shape: f32[1,128], index: 2, kind: input, shape index: {}]
  %s3 = inlined_call_operand.hbm [shape: bf16[128,128], index: 3, kind: input, shape index: {}]
  %s4 = inlined_call_operand.vmem [shape: f32[1,128], index: 4, kind: input, shape index: {}]
  %s5 = inlined_call_operand.hbm [shape: f32[16,128], index: 5, kind: output, shape index: {}]
  %s6 = sld [smem:[#allocation0]]
  $region42: #{tpu_custom_call.1} parent=0
    _
  %s8 = ssub.s32 1, %s6
  %s9 = scalar_select 0, %s8, %s6
  $region1: #{tpu_custom_call.1} parent=0
    #allocation2 [shape = 'u8[4096]{0}', space=vmem, size = 0x1000, scoped, tag = 'input window, operand 0, single buffered']
    #allocation3 [shape = 's32[1]{0}', space=sflag, size = 0x4, scoped, tag = 'scoped memory for tpu_custom_call.1']
    #allocation4 [shape = 's32[1]{0}', space=sflag, size = 0x4, scoped, tag = 'scoped memory for tpu_custom_call.1']
    #allocation5 [shape = 'u8[32768]{0}', space=vmem, size = 0x8000, scoped, tag = 'input window, operand 1, single buffered']
    #allocation6 [shape = 's32[1]{0}', space=sflag, size = 0x4, scoped, tag = 'scoped memory for tpu_custom_call.1']
    #allocation7 [shape = 'u8[32768]{0}', space=vmem, size = 0x8000, scoped, tag = 'input window, operand 3, single buffered']
    #allocation8 [shape = 'u8[8192]{0}', space=vmem, size = 0x2000, scoped, tag = 'output window, operand 0, single buffered']
    %10 = vsyncpa [#allocation3], 0
    %11 = vsyncpa [#allocation6], 0
    %12 = vsyncpa [#allocation4], 0
    // Predicated region
    $region2: #{tpu_custom_call.1} parent=1 // pred_check
      _
    $region3: #{tpu_custom_call.1} parent=1 // pred_check_branch
      %14 = sbr.rel (0) target = $region5
    $region4: #{tpu_custom_call.1} parent=1 // pred_region
      %s16 = ssub.s32 128, 128
      %17 = vsyncadd [#allocation3], %s16
      %s18 = sshll.u32 [#allocation2], 4
      %s19 = int_to_ptr.vmem [resolvable:$true] %s18
      %24 = dma.hbm_to_vmem [thread:$0]  %s0, 128, %s19, [#allocation3], 64, 64, 4
    $region5: #{tpu_custom_call.1} parent=1 // pred_fallthru
      _
    // Predicated region
    $region6: #{tpu_custom_call.1} parent=1 // pred_check
      _
    $region7: #{tpu_custom_call.1} parent=1 // pred_check_branch
      %26 = sbr.rel (0) target = $region9
    $region8: #{tpu_custom_call.1} parent=1 // pred_region
      %s28 = ssub.s32 1024, 1024
      %29 = vsyncadd [#allocation6], %s28
      %s30 = sshll.u32 [#allocation5], 4
      %s31 = int_to_ptr.vmem [resolvable:$true] %s30
      %36 = dma.hbm_to_vmem [thread:$0]  %s1, 1024, %s31, [#allocation6], 64, 64, 4
    $region9: #{tpu_custom_call.1} parent=1 // pred_fallthru
      _
    // Predicated region
    $region10: #{tpu_custom_call.1} parent=1 // pred_check
      _
    $region11: #{tpu_custom_call.1} parent=1 // pred_check_branch
      %38 = sbr.rel (0) target = $region13
    $region12: #{tpu_custom_call.1} parent=1 // pred_region
      _
    $region13: #{tpu_custom_call.1} parent=1 // pred_fallthru
      _
    // Predicated region
    $region14: #{tpu_custom_call.1} parent=1 // pred_check
      _
    $region15: #{tpu_custom_call.1} parent=1 // pred_check_branch
      %40 = sbr.rel (0) target = $region17
    $region16: #{tpu_custom_call.1} parent=1 // pred_region
      %s42 = ssub.s32 1024, 1024
      %43 = vsyncadd [#allocation6], %s42
      %s44 = sshll.u32 [#allocation7], 4
      %s45 = int_to_ptr.vmem [resolvable:$true] %s44
      %50 = dma.hbm_to_vmem [thread:$0]  %s3, 1024, %s45, [#allocation6], 64, 64, 4
    $region17: #{tpu_custom_call.1} parent=1 // pred_fallthru
      _
    // Predicated region
    $region18: #{tpu_custom_call.1} parent=1 // pred_check
      _
    $region19: #{tpu_custom_call.1} parent=1 // pred_check_branch
      %52 = sbr.rel (0) target = $region21
    $region20: #{tpu_custom_call.1} parent=1 // pred_region
      _
    $region21: #{tpu_custom_call.1} parent=1 // pred_fallthru
      _
    // Predicated region
    $region22: #{tpu_custom_call.1} parent=1 // pred_check
      _
    $region23: #{tpu_custom_call.1} parent=1 // pred_check_branch
      %54 = sbr.rel (0) target = $region25
    $region24: #{tpu_custom_call.1} parent=1 // pred_region
      %55 = dma.done [#allocation3], 128
    $region25: #{tpu_custom_call.1} parent=1 // pred_fallthru
      _
    // Predicated region
    $region26: #{tpu_custom_call.1} parent=1 // pred_check
      _
    $region27: #{tpu_custom_call.1} parent=1 // pred_check_branch
      %57 = sbr.rel (0) target = $region29
    $region28: #{tpu_custom_call.1} parent=1 // pred_region
      %58 = dma.done [#allocation6], 1024
    $region29: #{tpu_custom_call.1} parent=1 // pred_fallthru
      _
    // Predicated region
    $region30: #{tpu_custom_call.1} parent=1 // pred_check
      _
    $region31: #{tpu_custom_call.1} parent=1 // pred_check_branch
      %60 = sbr.rel (0) target = $region33
    $region32: #{tpu_custom_call.1} parent=1 // pred_region
      %61 = dma.done [#allocation6], 1024
    $region33: #{tpu_custom_call.1} parent=1 // pred_fallthru
      _
    %v63 = vld [vmem:[#allocation2] sm:$0xf]
    %v64 = vld [vmem:[#allocation2 + $0x4] sm:$0xf]
    %v65 = vld [vmem:[#allocation5] sm:$0xf]
    %v66 = vld [vmem:[#allocation5 + $0x4] sm:$0xf]
    %v67 = vld [vmem:[#allocation5 + $0x8] sm:$0xf]
    %v68 = vld [vmem:[#allocation5 + $0xc] sm:$0xf]
    %v69 = vld [vmem:[#allocation5 + $0x10] sm:$0xf]
    %v70 = vld [vmem:[#allocation5 + $0x14] sm:$0xf]
    %v71 = vld [vmem:[#allocation5 + $0x18] sm:$0xf]
    %v72 = vld [vmem:[#allocation5 + $0x1c] sm:$0xf]
    %v73 = vld [vmem:[#allocation5 + $0x20] sm:$0xf]
    %v74 = vld [vmem:[#allocation5 + $0x24] sm:$0xf]
    %v75 = vld [vmem:[#allocation5 + $0x28] sm:$0xf]
    %v76 = vld [vmem:[#allocation5 + $0x2c] sm:$0xf]
    %v77 = vld [vmem:[#allocation5 + $0x30] sm:$0xf]
    %v78 = vld [vmem:[#allocation5 + $0x34] sm:$0xf]
    %v79 = vld [vmem:[#allocation5 + $0x38] sm:$0xf]
    %v80 = vld [vmem:[#allocation5 + $0x3c] sm:$0xf]
    %v81 = vld [vmem:[%s2] sm:$0x1]
    %v83 = vlaneseq
    %v84 = vshrl.u32 %v83, 7
    %v85 = vsub.s32 0, %v84
    %v86 = vrot.slane %v81, %v85
    %v90 = vunpack.c.l.b16 %v63
    %v91 = vunpack.c.l.b16 %v64
    %v92 = vpack.c.b16 %v91, %v90
    %v110 = vunpack.c.l.b16 %v65
    %v111 = vunpack.c.l.b16 %v66
    %v112 = vunpack.c.l.b16 %v67
    %v113 = vunpack.c.l.b16 %v68
    %v114 = vunpack.c.l.b16 %v69
    %v115 = vunpack.c.l.b16 %v70
    %v116 = vunpack.c.l.b16 %v71
    %v117 = vunpack.c.l.b16 %v72
    %v118 = vunpack.c.l.b16 %v73
    %v119 = vunpack.c.l.b16 %v74
    %v120 = vunpack.c.l.b16 %v75
    %v121 = vunpack.c.l.b16 %v76
    %v122 = vunpack.c.l.b16 %v77
    %v123 = vunpack.c.l.b16 %v78
    %v124 = vunpack.c.l.b16 %v79
    %v125 = vunpack.c.l.b16 %v80
    %v126 = vpack.c.b16 %v111, %v110
    %v127 = vpack.c.b16 %v113, %v112
    %v128 = vpack.c.b16 %v115, %v114
    %v129 = vpack.c.b16 %v117, %v116
    %v130 = vpack.c.b16 %v119, %v118
    %v131 = vpack.c.b16 %v121, %v120
    %v132 = vpack.c.b16 %v123, %v122
    %v133 = vpack.c.b16 %v125, %v124
    %142 = vmatprep.subr.bf16.mxu0 0
    %143 = vmatpush1.bf16.msra.mxu0 %v133
    %144 = vmatprep.subr.bf16.mxu0 0
    %145 = vmatpush1.bf16.msra.mxu0 %v132
    %146 = vmatprep.subr.bf16.mxu0 0
    %147 = vmatpush1.bf16.msra.mxu0 %v131
    %148 = vmatprep.subr.bf16.mxu0 0
    %149 = vmatpush1.bf16.msra.mxu0 %v130
    %150 = vmatprep.subr.bf16.mxu0 0
    %151 = vmatpush1.bf16.msra.mxu0 %v129
    %152 = vmatprep.subr.bf16.mxu0 0
    %153 = vmatpush1.bf16.msra.mxu0 %v128
    %154 = vmatprep.subr.bf16.mxu0 0
    %155 = vmatpush1.bf16.msra.mxu0 %v127
    %156 = vmatprep.subr.bf16.mxu0 0
    %157 = vmatpush1.bf16.msra.mxu0 %v126
    %158 = vmatprep.subr.bf16.mxu0 0
    %159 = vmatpush2.bf16.msra.mxu0 0
    %160 = vmatprep.subr.bf16.mxu0 0
    %161 = vmatpush2.bf16.msra.mxu0 0
    %162 = vmatprep.subr.bf16.mxu0 0
    %163 = vmatpush2.bf16.msra.mxu0 0
    %164 = vmatprep.subr.bf16.mxu0 0
    %165 = vmatpush2.bf16.msra.mxu0 0
    %166 = vmatprep.subr.bf16.mxu0 0
    %167 = vmatpush2.bf16.msra.mxu0 0
    %168 = vmatprep.subr.bf16.mxu0 0
    %169 = vmatpush2.bf16.msra.mxu0 0
    %170 = vmatprep.subr.bf16.mxu0 0
    %171 = vmatpush2.bf16.msra.mxu0 0
    %172 = vmatprep.subr.bf16.mxu0 0
    %173 = vmatpush2.bf16.msra.mxu0 0
    %174 = vmatprep.mubr.bf16.mxu0 0
    %175 = vmatmul.mubr.bf16.gmra.mxu0 %v92
    %v176 = vpop.f32.mrf.mxu0
    %v177 = vadd.f32 %v86, %v176
    %v178 = vpop.f32.mrf.mxu0
    %v179 = vpop.f32.mrf.mxu0
    %v180 = vadd.f32 %v86, %v179
    %v181 = vpop.f32.mrf.mxu0
    %182 = vdwg.mxu0
    %v183 = vmul.f32 %v177, 0.5
    %v184 = vmul.f32 %v180, 0.5
    %v185 = vmul.f32 %v177, 0.70710677
    %v186 = vmul.f32 %v180, 0.70710677
    %v187 = verf.f32.pop %v185
    %v188 = verf.f32.pop %v186
    %v189 = vadd.f32 %v187, 1.0
    %v190 = vadd.f32 %v188, 1.0
    %v191 = vmul.f32 %v183, %v189
    %v192 = vmul.f32 %v184, %v190
    %v193 = vpack.c.bf16 %v192, %v191
    %v194 = vld [vmem:[#allocation7] sm:$0xf]
    %v195 = vld [vmem:[#allocation7 + $0x4] sm:$0xf]
    %v196 = vld [vmem:[#allocation7 + $0x8] sm:$0xf]
    %v197 = vld [vmem:[#allocation7 + $0xc] sm:$0xf]
    %v198 = vld [vmem:[#allocation7 + $0x10] sm:$0xf]
    %v199 = vld [vmem:[#allocation7 + $0x14] sm:$0xf]
    %v200 = vld [vmem:[#allocation7 + $0x18] sm:$0xf]
    %v201 = vld [vmem:[#allocation7 + $0x1c] sm:$0xf]
    %v202 = vld [vmem:[#allocation7 + $0x20] sm:$0xf]
    %v203 = vld [vmem:[#allocation7 + $0x24] sm:$0xf]
    %v204 = vld [vmem:[#allocation7 + $0x28] sm:$0xf]
    %v205 = vld [vmem:[#allocation7 + $0x2c] sm:$0xf]
    %v206 = vld [vmem:[#allocation7 + $0x30] sm:$0xf]
    %v207 = vld [vmem:[#allocation7 + $0x34] sm:$0xf]
    %v208 = vld [vmem:[#allocation7 + $0x38] sm:$0xf]
    %v209 = vld [vmem:[#allocation7 + $0x3c] sm:$0xf]
    %v210 = vld [vmem:[%s4] sm:$0x1]
    %v212 = vlaneseq
    %v213 = vshrl.u32 %v212, 7
    %v214 = vsub.s32 0, %v213
    %v215 = vrot.slane %v210, %v214
    %v233 = vunpack.c.l.b16 %v194
    %v234 = vunpack.c.l.b16 %v195
    %v235 = vunpack.c.l.b16 %v196
    %v236 = vunpack.c.l.b16 %v197
    %v237 = vunpack.c.l.b16 %v198
    %v238 = vunpack.c.l.b16 %v199
    %v239 = vunpack.c.l.b16 %v200
    %v240 = vunpack.c.l.b16 %v201
    %v241 = vunpack.c.l.b16 %v202
    %v242 = vunpack.c.l.b16 %v203
    %v243 = vunpack.c.l.b16 %v204
    %v244 = vunpack.c.l.b16 %v205
    %v245 = vunpack.c.l.b16 %v206
    %v246 = vunpack.c.l.b16 %v207
    %v247 = vunpack.c.l.b16 %v208
    %v248 = vunpack.c.l.b16 %v209
    %v249 = vpack.c.b16 %v234, %v233
    %v250 = vpack.c.b16 %v236, %v235
    %v251 = vpack.c.b16 %v238, %v237
    %v252 = vpack.c.b16 %v240, %v239
    %v253 = vpack.c.b16 %v242, %v241
    %v254 = vpack.c.b16 %v244, %v243
    %v255 = vpack.c.b16 %v246, %v245
    %v256 = vpack.c.b16 %v248, %v247
    %265 = vmatprep.subr.bf16.mxu0 0
    %266 = vmatpush1.bf16.msra.mxu0 %v256
    %267 = vmatprep.subr.bf16.mxu0 0
    %268 = vmatpush1.bf16.msra.mxu0 %v255
    %269 = vmatprep.subr.bf16.mxu0 0
    %270 = vmatpush1.bf16.msra.mxu0 %v254
    %271 = vmatprep.subr.bf16.mxu0 0
    %272 = vmatpush1.bf16.msra.mxu0 %v253
    %273 = vmatprep.subr.bf16.mxu0 0
    %274 = vmatpush1.bf16.msra.mxu0 %v252
    %275 = vmatprep.subr.bf16.mxu0 0
    %276 = vmatpush1.bf16.msra.mxu0 %v251
    %277 = vmatprep.subr.bf16.mxu0 0
    %278 = vmatpush1.bf16.msra.mxu0 %v250
    %279 = vmatprep.subr.bf16.mxu0 0
    %280 = vmatpush1.bf16.msra.mxu0 %v249
    %281 = vmatprep.subr.bf16.mxu0 0
    %282 = vmatpush2.bf16.msra.mxu0 0
    %283 = vmatprep.subr.bf16.mxu0 0
    %284 = vmatpush2.bf16.msra.mxu0 0
    %285 = vmatprep.subr.bf16.mxu0 0
    %286 = vmatpush2.bf16.msra.mxu0 0
    %287 = vmatprep.subr.bf16.mxu0 0
    %288 = vmatpush2.bf16.msra.mxu0 0
    %289 = vmatprep.subr.bf16.mxu0 0
    %290 = vmatpush2.bf16.msra.mxu0 0
    %291 = vmatprep.subr.bf16.mxu0 0
    %292 = vmatpush2.bf16.msra.mxu0 0
    %293 = vmatprep.subr.bf16.mxu0 0
    %294 = vmatpush2.bf16.msra.mxu0 0
    %295 = vmatprep.subr.bf16.mxu0 0
    %296 = vmatpush2.bf16.msra.mxu0 0
    %297 = vmatprep.mubr.bf16.mxu0 0
    %298 = vmatmul.mubr.bf16.gmra.mxu0 %v193
    %v299 = vpop.f32.mrf.mxu0
    %v300 = vadd.f32 %v215, %v299
    %v301 = vpop.f32.mrf.mxu0
    %v302 = vpop.f32.mrf.mxu0
    %v303 = vadd.f32 %v215, %v302
    %v304 = vpop.f32.mrf.mxu0
    %305 = vdwg.mxu0
    %306 = vst [vmem:[#allocation8] sm:$0xff] %v300
    %307 = vst [vmem:[#allocation8 + $0x8] sm:$0xff] %v303
    // Predicated region
    $region34: #{tpu_custom_call.1} parent=1 // pred_check
      _
    $region35: #{tpu_custom_call.1} parent=1 // pred_check_branch
      %309 = sbr.rel (0) target = $region37
    $region36: #{tpu_custom_call.1} parent=1 // pred_region
      %s311 = ssub.s32 256, 256
      %312 = vsyncadd [#allocation4], %s311
      %s313 = sshll.u32 [#allocation8], 4
      %s314 = int_to_ptr.vmem [resolvable:$true] %s313
      %319 = dma.vmem_to_hbm [thread:$0]  %s314, 256, %s5, [#allocation4], 128, 128, 8
    $region37: #{tpu_custom_call.1} parent=1 // pred_fallthru
      _
    // Predicated region
    $region38: #{tpu_custom_call.1} parent=1 // pred_check
      _
    $region39: #{tpu_custom_call.1} parent=1 // pred_check_branch
      %321 = sbr.rel (0) target = $region41
    $region40: #{tpu_custom_call.1} parent=1 // pred_region
      %322 = dma.done [#allocation4], 256
    $region41: #{tpu_custom_call.1} parent=1 // pred_fallthru
      _
    %323 = vsyncpa [#allocation3], 1
    %324 = vsyncpa [#allocation6], 1
    %325 = vsyncpa [#allocation4], 1

</llo_original>
